<compile_context>
chip_gen: v5e
topology: v5e:2x2
jax: 0.10.0
libtpu: 0.0.40
codegen_flags: <defaults>
</compile_context>

<pallas_src>
import math
import numpy as np

import jax
import jax.numpy as jnp
from jax.experimental import pallas as pl
from jax.experimental.pallas import tpu as pltpu


def _make_sg_kernel(num_basis, C, has_view):
    nb = num_basis

    def kernel(dirs_ref, mu_ref, rough_ref, out_ref):
        """One tile of TM columns.

        dirs_ref : (6 or 9, TM)  rows = [light_xyz, (view_xyz,) normal_xyz]
        mu_ref   : (C*nb, TM)    channel-major rows (row = c*nb + b)
        rough_ref: (nb, 1)       10**k per basis
        out_ref  : (C*nb, TM)
        """

        def _normalize(x):
            # torch.nn.functional.normalize: x / max(||x||, 1e-12)
            #   == x * rsqrt(max(||x||^2, 1e-24)).
            # One EUP rsqrt + a Newton-Raphson step (pure VPU) replaces
            # sqrt + divide (~4x less EUP work per normalize).
            nrm2 = jnp.maximum(jnp.sum(x * x, axis=0, keepdims=True), 1e-24)
            inv = jax.lax.rsqrt(nrm2)
            inv = inv * (1.5 - 0.5 * nrm2 * inv * inv)
            return x * inv

        l = _normalize(dirs_ref[0:3, :])
        if has_view:
            v = _normalize(dirs_ref[3:6, :])
            n = _normalize(dirs_ref[6:9, :])
            h = _normalize(l + v)          # the /2 cancels under normalization
        else:
            n = _normalize(dirs_ref[3:6, :])
            # Default view = (0, 0, -1) is already unit norm -> no HBM read;
            # h = normalize(l + v) with v folded in as a constant.
            row = jax.lax.broadcasted_iota(jnp.int32, l.shape, 0)
            h = _normalize(jnp.where(row == 2, l - 1.0, l))

        # dot(H, normal) along the component (sublane) axis -> (1, TM)
        d = jnp.sum(h * n, axis=0, keepdims=True)

        # exp evaluated once per basis (nb rows), reused for every channel.
        e = jnp.exp(rough_ref[...] * (d - 1.0))               # (nb, TM)

        for c in range(C):                                    # static unroll
            sl = slice(c * nb, (c + 1) * nb)
            out_ref[sl, :] = jnp.abs(mu_ref[sl, :]) * e

    return kernel


def _round_up(x, m):
    return (x + m - 1) // m * m


def spherical_gaussian(light, normal, mu, k, view=None, *, tile_m=1024):
    """JAX/Pallas equivalent of Spherical_Gaussian.forward.

    light/normal/view : [..., 3] float32
    mu                : [..., num_basis, C] float32
    k                 : [1, num_basis] (log10 roughness parameter)
    returns           : [..., num_basis, C] float32
    """
    lead = light.shape[:-1]
    num_basis, C = mu.shape[-2], mu.shape[-1]
    M = math.prod(lead)
    NBc = num_basis * C
    has_view = view is not None

    tile_m = _round_up(max(128, tile_m), 128)
    tile_m = min(tile_m, _round_up(M, 128))
    Mp = _round_up(M, tile_m)              # cdiv grid via padding; no divisibility assert

    # --- layout glue ----------------------------------------------------------
    # TODO(synk): in a real pipeline the producer/consumer should emit/accept the
    # channel-major (C*nb, M) layout directly so these transpose passes vanish.
    parts = [light.reshape(M, 3)]
    if has_view:
        parts.append(view.reshape(M, 3))
    parts.append(normal.reshape(M, 3))
    dirs_f = jnp.concatenate(parts, axis=1).astype(jnp.float32).T     # (6|9, M)

    # channel-major rows: row index = c*num_basis + b
    mu_f = jnp.transpose(mu.reshape(M, num_basis, C).astype(jnp.float32),
                         (2, 1, 0)).reshape(NBc, M)

    rough = (10.0 ** k.reshape(-1)).astype(jnp.float32)[:, None]      # (nb, 1)

    if Mp != M:
        dirs_f = jnp.pad(dirs_f, ((0, 0), (0, Mp - M)))
        mu_f = jnp.pad(mu_f, ((0, 0), (0, Mp - M)))

    n_dirs = dirs_f.shape[0]
    kernel = _make_sg_kernel(num_basis, C, has_view)

    out = pl.pallas_call(
        kernel,
        out_shape=jax.ShapeDtypeStruct((NBc, Mp), jnp.float32),
        grid_spec=pltpu.PrefetchScalarGridSpec(
            num_scalar_prefetch=0,
            grid=(Mp // tile_m,),
            in_specs=[
                pl.BlockSpec((n_dirs, tile_m), lambda i: (0, i)),     # packed dirs
                pl.BlockSpec((NBc, tile_m), lambda i: (0, i)),        # mu (C-major)
                pl.BlockSpec((num_basis, 1), lambda i: (0, 0)),       # roughness
            ],
            out_specs=pl.BlockSpec((NBc, tile_m), lambda i: (0, i)),
        ),
        compiler_params=pltpu.CompilerParams(dimension_semantics=("parallel",)),
    )(dirs_f, mu_f, rough)

    # --- inverse of the channel-major permutation -----------------------------
    out = out[:, :M].reshape(C, num_basis, M).transpose(2, 1, 0)      # (M, nb, C)
    return out.reshape(lead + (num_basis, C))


def _reference(light, normal, mu, k, view=None):
    """Pure-JAX reference replicating the PyTorch forward exactly."""
    if view is None:
        view = jnp.zeros_like(light).at[..., 2].set(-1.0)

    def nz(x):
        return x / jnp.maximum(jnp.linalg.norm(x, axis=-1, keepdims=True), 1e-12)

    l, v, n = nz(light), nz(view), nz(normal)
    h = nz((l + v) / 2.0)
    rough = 10.0 ** k
    dot = jnp.sum(h * n, axis=-1, keepdims=True)
    return jnp.abs(mu) * jnp.exp(rough * (dot - 1.0))[..., None]


if __name__ == "__main__":
    num_basis, C = 8, 3
    k_low, k_high = 1.0, 100.0
    # Deterministic parameter init, exactly as in __init__ (trainable_k path):
    k_param = jnp.linspace(
        math.log10(k_high), math.log10(k_low), num_basis, dtype=jnp.float32
    )[None, :]

    key = jax.random.PRNGKey(0)
    k1, k2, k3, k4, k5, k6 = jax.random.split(key, 6)

    # --- case 1: default view, evenly tiled (grid >= 2 for megacore) ---------
    B, N = 2, 1024
    light = jax.random.normal(k1, (B, N, 3), dtype=jnp.float32)
    normal = jax.random.normal(k2, (B, N, 3), dtype=jnp.float32)
    mu = jax.random.normal(k3, (B, N, num_basis, C), dtype=jnp.float32)

    out = jax.block_until_ready(spherical_gaussian(light, normal, mu, k_param))
    ref = _reference(light, normal, mu, k_param)
    assert out.shape == ref.shape == (B, N, num_basis, C)
    np.testing.assert_allclose(np.asarray(out), np.asarray(ref),
                               rtol=1e-4, atol=1e-5)

    # --- case 2: explicit view, ragged M (exercises the padded tail) ---------
    B2, N2 = 2, 1000
    light2 = jax.random.normal(k4, (B2, N2, 3), dtype=jnp.float32)
    normal2 = jax.random.normal(k5, (B2, N2, 3), dtype=jnp.float32)
    mu2 = jax.random.normal(k6, (B2, N2, num_basis, C), dtype=jnp.float32)
    view2 = jax.random.normal(jax.random.PRNGKey(7), (B2, N2, 3), dtype=jnp.float32)

    out2 = jax.block_until_ready(
        spherical_gaussian(light2, normal2, mu2, k_param, view=view2))
    ref2 = _reference(light2, normal2, mu2, k_param, view=view2)
    assert out2.shape == ref2.shape == (B2, N2, num_basis, C)
    np.testing.assert_allclose(np.asarray(out2), np.asarray(ref2),
                               rtol=1e-4, atol=1e-5)

    print("KERNEL_OK")
</pallas_src>

<mosaic_0001>
module attributes {stable_mosaic.version = 11 : i64} {
  func.func @kernel(%arg0: i32, %arg1: memref<6x1024xf32, #tpu.memory_space<vmem>>, %arg2: memref<24x1024xf32, #tpu.memory_space<vmem>>, %arg3: memref<8x1xf32, #tpu.memory_space<vmem>>, %arg4: memref<24x1024xf32, #tpu.memory_space<vmem>>) attributes {dimension_semantics = [#tpu.dimension_semantics<parallel>], iteration_bounds = array<i64: 2>, scalar_prefetch = 0 : i64, scratch_operands = 0 : i64, tpu.core_type = #tpu.core_type<tc>, window_params = [{transform_indices = @transform_0, window_bounds = array<i64: 6, 1024>}, {transform_indices = @transform_1, window_bounds = array<i64: 24, 1024>}, {pipeline_mode = #tpu.pipeline_mode<synchronous>, transform_indices = @transform_2, window_bounds = array<i64: 8, 1>}, {transform_indices = @transform_3, window_bounds = array<i64: 24, 1024>}]} {
    %c0 = arith.constant 0 : index
    %c0_0 = arith.constant 0 : index
    %0 = vector.load %arg1[%c0, %c0_0] : memref<6x1024xf32, #tpu.memory_space<vmem>>, vector<3x1024xf32>
    %1 = arith.mulf %0, %0 : vector<3x1024xf32>
    %cst = arith.constant dense<0.000000e+00> : vector<1024xf32>
    %2 = vector.multi_reduction <add>, %1, %cst [0] : vector<3x1024xf32> to vector<1024xf32>
    %3 = vector.shape_cast %2 : vector<1024xf32> to vector<1x1024xf32>
    %cst_1 = arith.constant 1.000000e-24 : f32
    %4 = vector.broadcast %cst_1 : f32 to vector<1x1024xf32>
    %5 = arith.maximumf %3, %4 : vector<1x1024xf32>
    %6 = math.rsqrt %5 : vector<1x1024xf32>
    %cst_2 = arith.constant 5.000000e-01 : f32
    %7 = vector.broadcast %cst_2 : f32 to vector<1x1024xf32>
    %8 = arith.mulf %7, %5 : vector<1x1024xf32>
    %9 = arith.mulf %8, %6 : vector<1x1024xf32>
    %10 = arith.mulf %9, %6 : vector<1x1024xf32>
    %cst_3 = arith.constant 1.500000e+00 : f32
    %11 = vector.broadcast %cst_3 : f32 to vector<1x1024xf32>
    %12 = arith.subf %11, %10 : vector<1x1024xf32>
    %13 = arith.mulf %6, %12 : vector<1x1024xf32>
    %14 = vector.broadcast %13 : vector<1x1024xf32> to vector<3x1024xf32>
    %15 = arith.mulf %0, %14 : vector<3x1024xf32>
    %c3 = arith.constant 3 : index
    %c0_4 = arith.constant 0 : index
    %16 = vector.load %arg1[%c3, %c0_4] : memref<6x1024xf32, #tpu.memory_space<vmem>>, vector<3x1024xf32>
    %17 = arith.mulf %16, %16 : vector<3x1024xf32>
    %cst_5 = arith.constant dense<0.000000e+00> : vector<1024xf32>
    %18 = vector.multi_reduction <add>, %17, %cst_5 [0] : vector<3x1024xf32> to vector<1024xf32>
    %19 = vector.shape_cast %18 : vector<1024xf32> to vector<1x1024xf32>
    %cst_6 = arith.constant 1.000000e-24 : f32
    %20 = vector.broadcast %cst_6 : f32 to vector<1x1024xf32>
    %21 = arith.maximumf %19, %20 : vector<1x1024xf32>
    %22 = math.rsqrt %21 : vector<1x1024xf32>
    %cst_7 = arith.constant 5.000000e-01 : f32
    %23 = vector.broadcast %cst_7 : f32 to vector<1x1024xf32>
    %24 = arith.mulf %23, %21 : vector<1x1024xf32>
    %25 = arith.mulf %24, %22 : vector<1x1024xf32>
    %26 = arith.mulf %25, %22 : vector<1x1024xf32>
    %cst_8 = arith.constant 1.500000e+00 : f32
    %27 = vector.broadcast %cst_8 : f32 to vector<1x1024xf32>
    %28 = arith.subf %27, %26 : vector<1x1024xf32>
    %29 = arith.mulf %22, %28 : vector<1x1024xf32>
    %30 = vector.broadcast %29 : vector<1x1024xf32> to vector<3x1024xf32>
    %31 = arith.mulf %16, %30 : vector<3x1024xf32>
    %32 = tpu.iota {dimensions = array<i32: 0>} : vector<3x1024xi32>
    %c2_i32 = arith.constant 2 : i32
    %33 = vector.broadcast %c2_i32 : i32 to vector<3x1024xi32>
    %34 = arith.cmpi eq, %32, %33 : vector<3x1024xi32>
    %cst_9 = arith.constant 1.000000e+00 : f32
    %35 = vector.broadcast %cst_9 : f32 to vector<3x1024xf32>
    %36 = arith.subf %15, %35 : vector<3x1024xf32>
    %37 = arith.select %34, %36, %15 : vector<3x1024xi1>, vector<3x1024xf32>
    %38 = arith.mulf %37, %37 : vector<3x1024xf32>
    %cst_10 = arith.constant dense<0.000000e+00> : vector<1024xf32>
    %39 = vector.multi_reduction <add>, %38, %cst_10 [0] : vector<3x1024xf32> to vector<1024xf32>
    %40 = vector.shape_cast %39 : vector<1024xf32> to vector<1x1024xf32>
    %cst_11 = arith.constant 1.000000e-24 : f32
    %41 = vector.broadcast %cst_11 : f32 to vector<1x1024xf32>
    %42 = arith.maximumf %40, %41 : vector<1x1024xf32>
    %43 = math.rsqrt %42 : vector<1x1024xf32>
    %cst_12 = arith.constant 5.000000e-01 : f32
    %44 = vector.broadcast %cst_12 : f32 to vector<1x1024xf32>
    %45 = arith.mulf %44, %42 : vector<1x1024xf32>
    %46 = arith.mulf %45, %43 : vector<1x1024xf32>
    %47 = arith.mulf %46, %43 : vector<1x1024xf32>
    %cst_13 = arith.constant 1.500000e+00 : f32
    %48 = vector.broadcast %cst_13 : f32 to vector<1x1024xf32>
    %49 = arith.subf %48, %47 : vector<1x1024xf32>
    %50 = arith.mulf %43, %49 : vector<1x1024xf32>
    %51 = vector.broadcast %50 : vector<1x1024xf32> to vector<3x1024xf32>
    %52 = arith.mulf %37, %51 : vector<3x1024xf32>
    %53 = arith.mulf %52, %31 : vector<3x1024xf32>
    %cst_14 = arith.constant dense<0.000000e+00> : vector<1024xf32>
    %54 = vector.multi_reduction <add>, %53, %cst_14 [0] : vector<3x1024xf32> to vector<1024xf32>
    %55 = vector.shape_cast %54 : vector<1024xf32> to vector<1x1024xf32>
    %c0_15 = arith.constant 0 : index
    %c0_16 = arith.constant 0 : index
    %56 = vector.load %arg3[%c0_15, %c0_16] : memref<8x1xf32, #tpu.memory_space<vmem>>, vector<8x1xf32>
    %cst_17 = arith.constant 1.000000e+00 : f32
    %57 = vector.broadcast %cst_17 : f32 to vector<1x1024xf32>
    %58 = arith.subf %55, %57 : vector<1x1024xf32>
    %59 = vector.broadcast %56 : vector<8x1xf32> to vector<8x1024xf32>
    %60 = vector.broadcast %58 : vector<1x1024xf32> to vector<8x1024xf32>
    %61 = arith.mulf %59, %60 : vector<8x1024xf32>
    %62 = math.exp %61 : vector<8x1024xf32>
    %c0_18 = arith.constant 0 : index
    %c0_19 = arith.constant 0 : index
    %63 = vector.load %arg2[%c0_18, %c0_19] : memref<24x1024xf32, #tpu.memory_space<vmem>>, vector<8x1024xf32>
    %64 = math.absf %63 : vector<8x1024xf32>
    %65 = arith.mulf %64, %62 : vector<8x1024xf32>
    %c0_20 = arith.constant 0 : index
    %c0_21 = arith.constant 0 : index
    %66 = vector.load %arg4[%c0_20, %c0_21] : memref<24x1024xf32, #tpu.memory_space<vmem>>, vector<8x1024xf32>
    tpu.vector_store %arg4[%c0_20, %c0_21], %65 {strides = array<i32>} : memref<24x1024xf32, #tpu.memory_space<vmem>>, vector<8x1024xf32>,
    %c8 = arith.constant 8 : index
    %c0_22 = arith.constant 0 : index
    %67 = vector.load %arg2[%c8, %c0_22] : memref<24x1024xf32, #tpu.memory_space<vmem>>, vector<8x1024xf32>
    %68 = math.absf %67 : vector<8x1024xf32>
    %69 = arith.mulf %68, %62 : vector<8x1024xf32>
    %c8_23 = arith.constant 8 : index
    %c0_24 = arith.constant 0 : index
    %70 = vector.load %arg4[%c8_23, %c0_24] : memref<24x1024xf32, #tpu.memory_space<vmem>>, vector<8x1024xf32>
    tpu.vector_store %arg4[%c8_23, %c0_24], %69 {strides = array<i32>} : memref<24x1024xf32, #tpu.memory_space<vmem>>, vector<8x1024xf32>,
    %c16 = arith.constant 16 : index
    %c0_25 = arith.constant 0 : index
    %71 = vector.load %arg2[%c16, %c0_25] : memref<24x1024xf32, #tpu.memory_space<vmem>>, vector<8x1024xf32>
    %72 = math.absf %71 : vector<8x1024xf32>
    %73 = arith.mulf %72, %62 : vector<8x1024xf32>
    %c16_26 = arith.constant 16 : index
    %c0_27 = arith.constant 0 : index
    %74 = vector.load %arg4[%c16_26, %c0_27] : memref<24x1024xf32, #tpu.memory_space<vmem>>, vector<8x1024xf32>
    tpu.vector_store %arg4[%c16_26, %c0_27], %73 {strides = array<i32>} : memref<24x1024xf32, #tpu.memory_space<vmem>>, vector<8x1024xf32>,
    return
  }
  func.func @transform_0(%arg0: i32) -> (i32, i32) {
    %c0_i32 = arith.constant 0 : i32
    %c0_i32_0 = arith.constant 0 : i32
    return %c0_i32, %arg0 : i32, i32
  }
  func.func @transform_1(%arg0: i32) -> (i32, i32) {
    %c0_i32 = arith.constant 0 : i32
    %c0_i32_0 = arith.constant 0 : i32
    return %c0_i32, %arg0 : i32, i32
  }
  func.func @transform_2(%arg0: i32) -> (i32, i32) {
    %c0_i32 = arith.constant 0 : i32
    %c0_i32_0 = arith.constant 0 : i32
    %c0_i32_1 = arith.constant 0 : i32
    return %c0_i32, %c0_i32_0 : i32, i32
  }
  func.func @transform_3(%arg0: i32) -> (i32, i32) {
    %c0_i32 = arith.constant 0 : i32
    %c0_i32_0 = arith.constant 0 : i32
    return %c0_i32, %arg0 : i32, i32
  }
}

</mosaic_0001>

<llo_original>
// kernel: tpu_custom_call.1
$region0: #{tpu_custom_call.1}
  #allocation0 [shape = 'u32[]', space=smem, size = 0x4, offset = 0x4, fixed_abs, tag = 'smem constant byte address 0x4 - core index']
  #allocation1 [shape = 'u32[72,128]{1,0:T(1,128)}', space=vmem, size = 0x9000, scoped, tag = 'internal scratch']
  %s0 = inlined_call_operand.hbm [shape: f32[6,2048], index: 0, kind: input, shape index: {}]
  %s1 = inlined_call_operand.hbm [shape: f32[24,2048], index: 1, kind: input, shape index: {}]
  %s2 = inlined_call_operand.vmem [shape: f32[8,1], index: 2, kind: input, shape index: {}]
  %s3 = inlined_call_operand.hbm [shape: f32[24,2048], index: 3, kind: output, shape index: {}]
  %s4 = sld [smem:[#allocation0]]
  $region53: #{tpu_custom_call.1} parent=0
    _
  %s6 = ssub.s32 1, %s4
  %s7 = scalar_select 0, %s6, %s4
  $region1: #{tpu_custom_call.1} parent=0
    #allocation2 [shape = 'u8[65536]{0}', space=vmem, size = 0x10000, scoped, tag = 'input window, operand 0']
    #allocation3 [shape = 's32[2]{0}', space=sflag, size = 0x8, scoped, tag = 'scoped memory for tpu_custom_call.1']
    #allocation4 [shape = 's32[2]{0}', space=sflag, size = 0x8, scoped, tag = 'scoped memory for tpu_custom_call.1']
    #allocation5 [shape = 'u8[196608]{0}', space=vmem, size = 0x30000, scoped, tag = 'input window, operand 1']
    #allocation6 [shape = 's32[2]{0}', space=sflag, size = 0x8, scoped, tag = 'scoped memory for tpu_custom_call.1']
    #allocation7 [shape = 'u8[196608]{0}', space=vmem, size = 0x30000, scoped, tag = 'output window, operand 0']
    %8 = vsyncpa [#allocation3], 0
    %s9 = scalar_lea.sflag [#allocation3], 1
    %10 = vsyncpa %s9, 0
    %11 = vsyncpa [#allocation6], 0
    %s12 = scalar_lea.sflag [#allocation6], 1
    %13 = vsyncpa %s12, 0
    %14 = vsyncpa [#allocation4], 0
    %s15 = scalar_lea.sflag [#allocation4], 1
    %16 = vsyncpa %s15, 0
    loop: start=0, step=1, limit=4
    $region2: #{tpu_custom_call.1} parent=1 // loop_pre_header
      _
    $region3: #{tpu_custom_call.1} parent=1 // loop_header
      %s18 = sphi 0, %s22
      %p19 = scmp.ge.s32.totalorder %s18, 4
      %s28 = sphi 0, %s30
      %s31 = sphi 0, %s28
      %s32 = sphi 0, %s31
      %s48 = sphi 0, %s32
      %s54 = sphi 0, %s56
      %s57 = sphi 0, %s54
      %s58 = sphi 0, %s57
      %s74 = sphi 0, %s58
      %s78 = sphi 0, %s78
      %s80 = sphi 0, %s78
      %s81 = sphi 0, %s80
      %s95 = sphi 0, %s81
      %s101 = sphi 0, %s103
      %s104 = sphi 0, %s101
      %s105 = sphi 0, %s104
      %s121 = sphi 0, %s105
    $region4: #{tpu_custom_call.1} parent=1 // loop_header_branch
      %21 = sbr.rel (%p19) target = $region8
    $region5: #{tpu_custom_call.1} parent=1 // loop_body
      %s23 = ssub.s32 %s18, 1
      %s24 = ssub.s32 %s18, 2
      %s25 = sadd.s32 %s18, 1
      %s26 = ssub.s32 %s18, %s25
      %p27 = scmp.eq.s32.totalorder %s26, 0
      %s29 = sadd.s32 %s28, 1
      %s30 = scalar_select %p27, %s28, %s29
      %p33 = pneg %p27
      %p34 = scmp.eq.s32.totalorder %s18, 1
      %p35 = por %p33, %p34
      %p36 = scmp.ne.s32.totalorder %s28, %s31
      %p37 = scmp.eq.s32.totalorder %s18, 0
      %p38 = por %p36, %p37
      %p39 = scmp.ne.s32.totalorder %s28, %s31
      %p40 = scmp.eq.s32.totalorder %s23, 1
      %p41 = por %p39, %p40
      %p42 = scmp.ne.s32.totalorder %s31, %s32
      %p43 = scmp.eq.s32.totalorder %s23, 0
      %p44 = por %p42, %p43
      %p45 = scmp.ne.s32.totalorder %s31, %s32
      %p46 = scmp.eq.s32.totalorder %s24, 1
      %p47 = por %p45, %p46
      %p49 = scmp.ne.s32.totalorder %s32, %s48
      %p50 = scmp.eq.s32.totalorder %s24, 0
      %p51 = por %p49, %p50
      %s52 = ssub.s32 %s18, %s25
      %p53 = scmp.eq.s32.totalorder %s52, 0
      %s55 = sadd.s32 %s54, 1
      %s56 = scalar_select %p53, %s54, %s55
      %p59 = pneg %p53
      %p60 = scmp.eq.s32.totalorder %s18, 1
      %p61 = por %p59, %p60
      %p62 = scmp.ne.s32.totalorder %s54, %s57
      %p63 = scmp.eq.s32.totalorder %s18, 0
      %p64 = por %p62, %p63
      %p65 = scmp.ne.s32.totalorder %s54, %s57
      %p66 = scmp.eq.s32.totalorder %s23, 1
      %p67 = por %p65, %p66
      %p68 = scmp.ne.s32.totalorder %s57, %s58
      %p69 = scmp.eq.s32.totalorder %s23, 0
      %p70 = por %p68, %p69
      %p71 = scmp.ne.s32.totalorder %s57, %s58
      %p72 = scmp.eq.s32.totalorder %s24, 1
      %p73 = por %p71, %p72
      %p75 = scmp.ne.s32.totalorder %s58, %s74
      %p76 = scmp.eq.s32.totalorder %s24, 0
      %p77 = por %p75, %p76
      %s79 = sadd.s32 %s78, 1
      %p82 = scmp.eq.s32.totalorder %s18, 1
      %p83 = scmp.ne.s32.totalorder %s78, %s80
      %p84 = scmp.eq.s32.totalorder %s18, 0
      %p85 = por %p83, %p84
      %p86 = scmp.ne.s32.totalorder %s78, %s80
      %p87 = scmp.eq.s32.totalorder %s23, 1
      %p88 = por %p86, %p87
      %p89 = scmp.ne.s32.totalorder %s80, %s81
      %p90 = scmp.eq.s32.totalorder %s23, 0
      %p91 = por %p89, %p90
      %p92 = scmp.ne.s32.totalorder %s80, %s81
      %p93 = scmp.eq.s32.totalorder %s24, 1
      %p94 = por %p92, %p93
      %p96 = scmp.ne.s32.totalorder %s81, %s95
      %p97 = scmp.eq.s32.totalorder %s24, 0
      %p98 = por %p96, %p97
      %s99 = ssub.s32 %s18, %s25
      %p100 = scmp.eq.s32.totalorder %s99, 0
      %s102 = sadd.s32 %s101, 1
      %s103 = scalar_select %p100, %s101, %s102
      %p106 = pneg %p100
      %p107 = scmp.eq.s32.totalorder %s18, 1
      %p108 = por %p106, %p107
      %p109 = scmp.ne.s32.totalorder %s101, %s104
      %p110 = scmp.eq.s32.totalorder %s18, 0
      %p111 = por %p109, %p110
      %p112 = scmp.ne.s32.totalorder %s101, %s104
      %p113 = scmp.eq.s32.totalorder %s23, 1
      %p114 = por %p112, %p113
      %p115 = scmp.ne.s32.totalorder %s104, %s105
      %p116 = scmp.eq.s32.totalorder %s23, 0
      %p117 = por %p115, %p116
      %p118 = scmp.ne.s32.totalorder %s104, %s105
      %p119 = scmp.eq.s32.totalorder %s24, 1
      %p120 = por %p118, %p119
      %p122 = scmp.ne.s32.totalorder %s105, %s121
      %p123 = scmp.eq.s32.totalorder %s24, 0
      %p124 = por %p122, %p123
      %p125 = scmp.le.s32.totalorder 1, %s18
      %p126 = scmp.lt.s32.totalorder %s18, 3
      %p127 = pnand %p125, %p126
      %p128 = pneg %p127
      // Predicated region
      $region9: #{tpu_custom_call.1} parent=5 // pred_check
        _
      $region10: #{tpu_custom_call.1} parent=5 // pred_check_branch
        %130 = sbr.rel (%p127) target = $region12
      $region11: #{tpu_custom_call.1} parent=5 // pred_region
        %s131 = ssub.s32 %s18, 1
        // Predicated region
        $region13: #{tpu_custom_call.1} parent=11 // pred_check
          %p132 = pneg %p91
        $region14: #{tpu_custom_call.1} parent=11 // pred_check_branch
          %134 = sbr.rel (%p132) target = $region16
        $region15: #{tpu_custom_call.1} parent=11 // pred_region
          _
        $region16: #{tpu_custom_call.1} parent=11 // pred_fallthru
          _
      $region12: #{tpu_custom_call.1} parent=5 // pred_fallthru
        _
      %p135 = scmp.lt.s32.totalorder %s18, 2
      // Predicated region
      $region17: #{tpu_custom_call.1} parent=5 // pred_check
        %p136 = pneg %p135
      $region18: #{tpu_custom_call.1} parent=5 // pred_check_branch
        %138 = sbr.rel (%p136) target = $region20
      $region19: #{tpu_custom_call.1} parent=5 // pred_region
        // Predicated region
        $region21: #{tpu_custom_call.1} parent=19 // pred_check
          %p139 = pneg %p38
        $region22: #{tpu_custom_call.1} parent=19 // pred_check_branch
          %141 = sbr.rel (%p139) target = $region24
        $region23: #{tpu_custom_call.1} parent=19 // pred_region
          %s142 = sand.u32 %s28, 1
          %s143 = scalar_lea.sflag [#allocation3], %s142
          %s144 = sand.u32 %s28, 1
          %s145 = smul.addr %s144, 64
          %s146 = scalar_lea.vmem [#allocation2], %s145
          %s147 = smul.u32 8, %s18
          %149 = vsyncadd %s143, 0
          %s150 = smul.addr %s147, 8
          %s151 = scalar_lea.hbm %s0, %s150
          %s153 = sshll.u32 %s151, 4
          %s154 = int_to_ptr.hbm [resolvable:$true] %s153
          %s155 = sshll.u32 %s146, 4
          %s156 = int_to_ptr.vmem [resolvable:$true] %s155
          %158 = dma.hbm_to_vmem [thread:$0]  %s154, 1024, %s156, %s143
        $region24: #{tpu_custom_call.1} parent=19 // pred_fallthru
          _
        // Predicated region
        $region25: #{tpu_custom_call.1} parent=19 // pred_check
          %p159 = pneg %p64
        $region26: #{tpu_custom_call.1} parent=19 // pred_check_branch
          %161 = sbr.rel (%p159) target = $region28
        $region27: #{tpu_custom_call.1} parent=19 // pred_region
          %s162 = sand.u32 %s54, 1
          %s163 = scalar_lea.sflag [#allocation6], %s162
          %s164 = sand.u32 %s54, 1
          %s165 = smul.addr %s164, 192
          %s166 = scalar_lea.vmem [#allocation5], %s165
          %s167 = smul.u32 8, %s18
          %169 = vsyncadd %s163, 0
          %s170 = smul.addr %s167, 8
          %s171 = scalar_lea.hbm %s1, %s170
          %s172 = sshll.u32 %s171, 4
          %s173 = int_to_ptr.hbm [resolvable:$true] %s172
          %s174 = sshll.u32 %s166, 4
          %s175 = int_to_ptr.vmem [resolvable:$true] %s174
          %180 = dma.hbm_to_vmem [thread:$0]  %s173, 3072, %s175, %s163, 2048, 1024, 64
        $region28: #{tpu_custom_call.1} parent=19 // pred_fallthru
          _
      $region20: #{tpu_custom_call.1} parent=5 // pred_fallthru
        _
      %p181 = scmp.le.s32.totalorder 1, %s18
      %p182 = scmp.lt.s32.totalorder %s18, 3
      %p183 = pnand %p181, %p182
      %p184 = pneg %p183
      // Predicated region
      $region29: #{tpu_custom_call.1} parent=5 // pred_check
        _
      $region30: #{tpu_custom_call.1} parent=5 // pred_check_branch
        %186 = sbr.rel (%p183) target = $region32
      $region31: #{tpu_custom_call.1} parent=5 // pred_region
        %s187 = ssub.s32 %s18, 1
        %s188 = sand.u32 %s31, 1
        %s189 = scalar_lea.sflag [#allocation3], %s188
        %s190 = sand.u32 %s31, 1
        %s191 = smul.addr %s190, 64
        %s192 = scalar_lea.vmem [#allocation2], %s191
        // Predicated region
        $region33: #{tpu_custom_call.1} parent=31 // pred_check
          %p193 = pneg %p44
        $region34: #{tpu_custom_call.1} parent=31 // pred_check_branch
          %195 = sbr.rel (%p193) target = $region36
        $region35: #{tpu_custom_call.1} parent=31 // pred_region
          %197 = dma.done %s189, 1024
        $region36: #{tpu_custom_call.1} parent=31 // pred_fallthru
          _
        %s198 = sand.u32 %s57, 1
        %s199 = scalar_lea.sflag [#allocation6], %s198
        %s200 = sand.u32 %s57, 1
        %s201 = smul.addr %s200, 192
        %s202 = scalar_lea.vmem [#allocation5], %s201
        // Predicated region
        $region37: #{tpu_custom_call.1} parent=31 // pred_check
          %p203 = pneg %p70
        $region38: #{tpu_custom_call.1} parent=31 // pred_check_branch
          %205 = sbr.rel (%p203) target = $region40
        $region39: #{tpu_custom_call.1} parent=31 // pred_region
          %207 = dma.done %s199, 3072
        $region40: #{tpu_custom_call.1} parent=31 // pred_fallthru
          _
        %s208 = sand.u32 %s31, 1
        %s209 = scalar_lea.sflag [#allocation3], %s208
        %s210 = sand.u32 %s31, 1
        %s211 = smul.addr %s210, 64
        %s212 = scalar_lea.vmem [#allocation2], %s211
        %p213 = pneg %p44
        %p214 = pneg %p41
        %s215 = sand.u32 %s57, 1
        %s216 = scalar_lea.sflag [#allocation6], %s215
        %s217 = sand.u32 %s57, 1
        %s218 = smul.addr %s217, 192
        %s219 = scalar_lea.vmem [#allocation5], %s218
        %p220 = pneg %p70
        %p221 = pneg %p67
        %p222 = pneg %p91
        %p223 = pneg %p88
        %p224 = pneg %p117
        %p225 = pneg %p114
        %s226 = sand.u32 %s104, 1
        %s227 = scalar_lea.sflag [#allocation4], %s226
        %s228 = sand.u32 %s104, 1
        %s229 = smul.addr %s228, 192
        %s230 = scalar_lea.vmem [#allocation7], %s229
        %s231 = smul.u32 8, %s23
        %s232 = smul.u32 8, %s23
        %s233 = smul.u32 8, %s23
        %v234 = vld [vmem:[%s192] sm:$0x7]
        %v235 = vld [vmem:[%s192 + $0x8] sm:$0x7]
        %v236 = vld [vmem:[%s192 + $0x10] sm:$0x7]
        %v237 = vld [vmem:[%s192 + $0x18] sm:$0x7]
        %v238 = vld [vmem:[%s192 + $0x20] sm:$0x7]
        %v239 = vld [vmem:[%s192 + $0x28] sm:$0x7]
        %v240 = vld [vmem:[%s192 + $0x30] sm:$0x7]
        %v241 = vld [vmem:[%s192 + $0x38] sm:$0x7]
        %v242 = vmul.f32 %v234, %v234
        %v243 = vmul.f32 %v235, %v235
        %v244 = vmul.f32 %v236, %v236
        %v245 = vmul.f32 %v237, %v237
        %v246 = vmul.f32 %v238, %v238
        %v247 = vmul.f32 %v239, %v239
        %v248 = vmul.f32 %v240, %v240
        %v249 = vmul.f32 %v241, %v241
        %vm250 = vcmask 1042432
        %v251 = vsel %vm250, %v242, 0.0
        %v252 = vrot.slane %v251, 4
        %v253 = vadd.f32 %v251, %v252
        %v254 = vrot.slane %v253, 2
        %v255 = vadd.f32 %v253, %v254
        %v256 = vrot.slane %v255, 1
        %v257 = vadd.f32 %v255, %v256
        %v258 = vsel %vm250, %v243, 0.0
        %v259 = vrot.slane %v258, 4
        %v260 = vadd.f32 %v258, %v259
        %v261 = vrot.slane %v260, 2
        %v262 = vadd.f32 %v260, %v261
        %v263 = vrot.slane %v262, 1
        %v264 = vadd.f32 %v262, %v263
        %v265 = vsel %vm250, %v244, 0.0
        %v266 = vrot.slane %v265, 4
        %v267 = vadd.f32 %v265, %v266
        %v268 = vrot.slane %v267, 2
        %v269 = vadd.f32 %v267, %v268
        %v270 = vrot.slane %v269, 1
        %v271 = vadd.f32 %v269, %v270
        %v272 = vsel %vm250, %v245, 0.0
        %v273 = vrot.slane %v272, 4
        %v274 = vadd.f32 %v272, %v273
        %v275 = vrot.slane %v274, 2
        %v276 = vadd.f32 %v274, %v275
        %v277 = vrot.slane %v276, 1
        %v278 = vadd.f32 %v276, %v277
        %v279 = vsel %vm250, %v246, 0.0
        %v280 = vrot.slane %v279, 4
        %v281 = vadd.f32 %v279, %v280
        %v282 = vrot.slane %v281, 2
        %v283 = vadd.f32 %v281, %v282
        %v284 = vrot.slane %v283, 1
        %v285 = vadd.f32 %v283, %v284
        %v286 = vsel %vm250, %v247, 0.0
        %v287 = vrot.slane %v286, 4
        %v288 = vadd.f32 %v286, %v287
        %v289 = vrot.slane %v288, 2
        %v290 = vadd.f32 %v288, %v289
        %v291 = vrot.slane %v290, 1
        %v292 = vadd.f32 %v290, %v291
        %v293 = vsel %vm250, %v248, 0.0
        %v294 = vrot.slane %v293, 4
        %v295 = vadd.f32 %v293, %v294
        %v296 = vrot.slane %v295, 2
        %v297 = vadd.f32 %v295, %v296
        %v298 = vrot.slane %v297, 1
        %v299 = vadd.f32 %v297, %v298
        %v300 = vsel %vm250, %v249, 0.0
        %v301 = vrot.slane %v300, 4
        %v302 = vadd.f32 %v300, %v301
        %v303 = vrot.slane %v302, 2
        %v304 = vadd.f32 %v302, %v303
        %v305 = vrot.slane %v304, 1
        %v306 = vadd.f32 %v304, %v305
        %v307 = vmax.f32 %v257, 1e-24
        %v308 = vmax.f32 %v264, 1e-24
        %v309 = vmax.f32 %v271, 1e-24
        %v310 = vmax.f32 %v278, 1e-24
        %v311 = vmax.f32 %v285, 1e-24
        %v312 = vmax.f32 %v292, 1e-24
        %v313 = vmax.f32 %v299, 1e-24
        %v314 = vmax.f32 %v306, 1e-24
        %v315 = vrsqrt.pop %v307
        %v316 = vmul.f32 %v315, %v307
        %v317 = vmul.f32 %v316, %v315
        %v318 = vmul.f32 0.5, %v317
        %v319 = vsub.f32 1.5, %v318
        %v320 = vmul.f32 %v315, %v319
        %vm321 = vweird.f32 %v307
        %vm322 = vweird.f32 %v315
        %vm323 = vmor %vm321, %vm322
        %v324 = vsel %vm323, %v315, %v320
        %v325 = vrsqrt.pop %v308
        %v326 = vmul.f32 %v325, %v308
        %v327 = vmul.f32 %v326, %v325
        %v328 = vmul.f32 0.5, %v327
        %v329 = vsub.f32 1.5, %v328
        %v330 = vmul.f32 %v325, %v329
        %vm331 = vweird.f32 %v308
        %vm332 = vweird.f32 %v325
        %vm333 = vmor %vm331, %vm332
        %v334 = vsel %vm333, %v325, %v330
        %v335 = vrsqrt.pop %v309
        %v336 = vmul.f32 %v335, %v309
        %v337 = vmul.f32 %v336, %v335
        %v338 = vmul.f32 0.5, %v337
        %v339 = vsub.f32 1.5, %v338
        %v340 = vmul.f32 %v335, %v339
        %vm341 = vweird.f32 %v309
        %vm342 = vweird.f32 %v335
        %vm343 = vmor %vm341, %vm342
        %v344 = vsel %vm343, %v335, %v340
        %v345 = vrsqrt.pop %v310
        %v346 = vmul.f32 %v345, %v310
        %v347 = vmul.f32 %v346, %v345
        %v348 = vmul.f32 0.5, %v347
        %v349 = vsub.f32 1.5, %v348
        %v350 = vmul.f32 %v345, %v349
        %vm351 = vweird.f32 %v310
        %vm352 = vweird.f32 %v345
        %vm353 = vmor %vm351, %vm352
        %v354 = vsel %vm353, %v345, %v350
        %v355 = vrsqrt.pop %v311
        %v356 = vmul.f32 %v355, %v311
        %v357 = vmul.f32 %v356, %v355
        %v358 = vmul.f32 0.5, %v357
        %v359 = vsub.f32 1.5, %v358
        %v360 = vmul.f32 %v355, %v359
        %vm361 = vweird.f32 %v311
        %vm362 = vweird.f32 %v355
        %vm363 = vmor %vm361, %vm362
        %v364 = vsel %vm363, %v355, %v360
        %v365 = vrsqrt.pop %v312
        %v366 = vmul.f32 %v365, %v312
        %v367 = vmul.f32 %v366, %v365
        %v368 = vmul.f32 0.5, %v367
        %v369 = vsub.f32 1.5, %v368
        %v370 = vmul.f32 %v365, %v369
        %vm371 = vweird.f32 %v312
        %vm372 = vweird.f32 %v365
        %vm373 = vmor %vm371, %vm372
        %v374 = vsel %vm373, %v365, %v370
        %v375 = vrsqrt.pop %v313
        %v376 = vmul.f32 %v375, %v313
        %v377 = vmul.f32 %v376, %v375
        %v378 = vmul.f32 0.5, %v377
        %v379 = vsub.f32 1.5, %v378
        %v380 = vmul.f32 %v375, %v379
        %vm381 = vweird.f32 %v313
        %vm382 = vweird.f32 %v375
        %vm383 = vmor %vm381, %vm382
        %v384 = vsel %vm383, %v375, %v380
        %v385 = vrsqrt.pop %v314
        %v386 = vmul.f32 %v385, %v314
        %v387 = vmul.f32 %v386, %v385
        %v388 = vmul.f32 0.5, %v387
        %v389 = vsub.f32 1.5, %v388
        %v390 = vmul.f32 %v385, %v389
        %vm391 = vweird.f32 %v314
        %vm392 = vweird.f32 %v385
        %vm393 = vmor %vm391, %vm392
        %v394 = vsel %vm393, %v385, %v390
        %v395 = vmul.f32 %v307, 0.5
        %v396 = vmul.f32 %v308, 0.5
        %v397 = vmul.f32 %v309, 0.5
        %v398 = vmul.f32 %v310, 0.5
        %v399 = vmul.f32 %v311, 0.5
        %v400 = vmul.f32 %v312, 0.5
        %v401 = vmul.f32 %v313, 0.5
        %v402 = vmul.f32 %v314, 0.5
        %v403 = vmul.f32 %v395, %v324
        %v404 = vmul.f32 %v396, %v334
        %v405 = vmul.f32 %v397, %v344
        %v406 = vmul.f32 %v398, %v354
        %v407 = vmul.f32 %v399, %v364
        %v408 = vmul.f32 %v400, %v374
        %v409 = vmul.f32 %v401, %v384
        %v410 = vmul.f32 %v402, %v394
        %v411 = vmul.f32 %v403, %v324
        %v412 = vmul.f32 %v404, %v334
        %v413 = vmul.f32 %v405, %v344
        %v414 = vmul.f32 %v406, %v354
        %v415 = vmul.f32 %v407, %v364
        %v416 = vmul.f32 %v408, %v374
        %v417 = vmul.f32 %v409, %v384
        %v418 = vmul.f32 %v410, %v394
        %v419 = vsub.f32 1.5, %v411
        %v420 = vsub.f32 1.5, %v412
        %v421 = vsub.f32 1.5, %v413
        %v422 = vsub.f32 1.5, %v414
        %v423 = vsub.f32 1.5, %v415
        %v424 = vsub.f32 1.5, %v416
        %v425 = vsub.f32 1.5, %v417
        %v426 = vsub.f32 1.5, %v418
        %v427 = vmul.f32 %v324, %v419
        %v428 = vmul.f32 %v334, %v420
        %v429 = vmul.f32 %v344, %v421
        %v430 = vmul.f32 %v354, %v422
        %v431 = vmul.f32 %v364, %v423
        %v432 = vmul.f32 %v374, %v424
        %v433 = vmul.f32 %v384, %v425
        %v434 = vmul.f32 %v394, %v426
        %v435 = vmul.f32 %v234, %v427
        %v436 = vmul.f32 %v235, %v428
        %v437 = vmul.f32 %v236, %v429
        %v438 = vmul.f32 %v237, %v430
        %v439 = vmul.f32 %v238, %v431
        %v440 = vmul.f32 %v239, %v432
        %v441 = vmul.f32 %v240, %v433
        %v442 = vmul.f32 %v241, %v434
        %v443 = vld [vmem:[%s192] sm:$0x38]
        %v444 = vld [vmem:[%s192 + $0x8] sm:$0x38]
        %v445 = vld [vmem:[%s192 + $0x10] sm:$0x38]
        %v446 = vld [vmem:[%s192 + $0x18] sm:$0x38]
        %v447 = vld [vmem:[%s192 + $0x20] sm:$0x38]
        %v448 = vld [vmem:[%s192 + $0x28] sm:$0x38]
        %v449 = vld [vmem:[%s192 + $0x30] sm:$0x38]
        %v450 = vld [vmem:[%s192 + $0x38] sm:$0x38]
        %v451 = vmul.f32 %v443, %v443
        %v452 = vmul.f32 %v444, %v444
        %v453 = vmul.f32 %v445, %v445
        %v454 = vmul.f32 %v446, %v446
        %v455 = vmul.f32 %v447, %v447
        %v456 = vmul.f32 %v448, %v448
        %v457 = vmul.f32 %v449, %v449
        %v458 = vmul.f32 %v450, %v450
        %v467 = vrot.slane %v451, 3
        %v468 = vrot.slane %v452, 3
        %v469 = vrot.slane %v453, 3
        %v470 = vrot.slane %v454, 3
        %v471 = vrot.slane %v455, 3
        %v472 = vrot.slane %v456, 3
        %v473 = vrot.slane %v457, 3
        %v474 = vrot.slane %v458, 3
        %v483 = vsel %vm250, %v467, 0.0
        %v484 = vrot.slane %v483, 4
        %v485 = vadd.f32 %v483, %v484
        %v486 = vrot.slane %v485, 2
        %v487 = vadd.f32 %v485, %v486
        %v488 = vrot.slane %v487, 1
        %v489 = vadd.f32 %v487, %v488
        %v490 = vsel %vm250, %v468, 0.0
        %v491 = vrot.slane %v490, 4
        %v492 = vadd.f32 %v490, %v491
        %v493 = vrot.slane %v492, 2
        %v494 = vadd.f32 %v492, %v493
        %v495 = vrot.slane %v494, 1
        %v496 = vadd.f32 %v494, %v495
        %v497 = vsel %vm250, %v469, 0.0
        %v498 = vrot.slane %v497, 4
        %v499 = vadd.f32 %v497, %v498
        %v500 = vrot.slane %v499, 2
        %v501 = vadd.f32 %v499, %v500
        %v502 = vrot.slane %v501, 1
        %v503 = vadd.f32 %v501, %v502
        %v504 = vsel %vm250, %v470, 0.0
        %v505 = vrot.slane %v504, 4
        %v506 = vadd.f32 %v504, %v505
        %v507 = vrot.slane %v506, 2
        %v508 = vadd.f32 %v506, %v507
        %v509 = vrot.slane %v508, 1
        %v510 = vadd.f32 %v508, %v509
        %v511 = vsel %vm250, %v471, 0.0
        %v512 = vrot.slane %v511, 4
        %v513 = vadd.f32 %v511, %v512
        %v514 = vrot.slane %v513, 2
        %v515 = vadd.f32 %v513, %v514
        %v516 = vrot.slane %v515, 1
        %v517 = vadd.f32 %v515, %v516
        %v518 = vsel %vm250, %v472, 0.0
        %v519 = vrot.slane %v518, 4
        %v520 = vadd.f32 %v518, %v519
        %v521 = vrot.slane %v520, 2
        %v522 = vadd.f32 %v520, %v521
        %v523 = vrot.slane %v522, 1
        %v524 = vadd.f32 %v522, %v523
        %v525 = vsel %vm250, %v473, 0.0
        %v526 = vrot.slane %v525, 4
        %v527 = vadd.f32 %v525, %v526
        %v528 = vrot.slane %v527, 2
        %v529 = vadd.f32 %v527, %v528
        %v530 = vrot.slane %v529, 1
        %v531 = vadd.f32 %v529, %v530
        %v532 = vsel %vm250, %v474, 0.0
        %v533 = vrot.slane %v532, 4
        %v534 = vadd.f32 %v532, %v533
        %v535 = vrot.slane %v534, 2
        %v536 = vadd.f32 %v534, %v535
        %v537 = vrot.slane %v536, 1
        %v538 = vadd.f32 %v536, %v537
        %v539 = vmax.f32 %v489, 1e-24
        %v540 = vmax.f32 %v496, 1e-24
        %v541 = vmax.f32 %v503, 1e-24
        %v542 = vmax.f32 %v510, 1e-24
        %v543 = vmax.f32 %v517, 1e-24
        %v544 = vmax.f32 %v524, 1e-24
        %v545 = vmax.f32 %v531, 1e-24
        %v546 = vmax.f32 %v538, 1e-24
        %v547 = vrsqrt.pop %v539
        %v548 = vmul.f32 %v547, %v539
        %v549 = vmul.f32 %v548, %v547
        %v550 = vmul.f32 0.5, %v549
        %v551 = vsub.f32 1.5, %v550
        %v552 = vmul.f32 %v547, %v551
        %vm553 = vweird.f32 %v539
        %vm554 = vweird.f32 %v547
        %vm555 = vmor %vm553, %vm554
        %v556 = vsel %vm555, %v547, %v552
        %v557 = vrsqrt.pop %v540
        %v558 = vmul.f32 %v557, %v540
        %v559 = vmul.f32 %v558, %v557
        %v560 = vmul.f32 0.5, %v559
        %v561 = vsub.f32 1.5, %v560
        %v562 = vmul.f32 %v557, %v561
        %vm563 = vweird.f32 %v540
        %vm564 = vweird.f32 %v557
        %vm565 = vmor %vm563, %vm564
        %v566 = vsel %vm565, %v557, %v562
        %v567 = vrsqrt.pop %v541
        %v568 = vmul.f32 %v567, %v541
        %v569 = vmul.f32 %v568, %v567
        %v570 = vmul.f32 0.5, %v569
        %v571 = vsub.f32 1.5, %v570
        %v572 = vmul.f32 %v567, %v571
        %vm573 = vweird.f32 %v541
        %vm574 = vweird.f32 %v567
        %vm575 = vmor %vm573, %vm574
        %v576 = vsel %vm575, %v567, %v572
        %v577 = vrsqrt.pop %v542
        %v578 = vmul.f32 %v577, %v542
        %v579 = vmul.f32 %v578, %v577
        %v580 = vmul.f32 0.5, %v579
        %v581 = vsub.f32 1.5, %v580
        %v582 = vmul.f32 %v577, %v581
        %vm583 = vweird.f32 %v542
        %vm584 = vweird.f32 %v577
        %vm585 = vmor %vm583, %vm584
        %v586 = vsel %vm585, %v577, %v582
        %v587 = vrsqrt.pop %v543
        %v588 = vmul.f32 %v587, %v543
        %v589 = vmul.f32 %v588, %v587
        %v590 = vmul.f32 0.5, %v589
        %v591 = vsub.f32 1.5, %v590
        %v592 = vmul.f32 %v587, %v591
        %vm593 = vweird.f32 %v543
        %vm594 = vweird.f32 %v587
        %vm595 = vmor %vm593, %vm594
        %v596 = vsel %vm595, %v587, %v592
        %v597 = vrsqrt.pop %v544
        %v598 = vmul.f32 %v597, %v544
        %v599 = vmul.f32 %v598, %v597
        %v600 = vmul.f32 0.5, %v599
        %v601 = vsub.f32 1.5, %v600
        %v602 = vmul.f32 %v597, %v601
        %vm603 = vweird.f32 %v544
        %vm604 = vweird.f32 %v597
        %vm605 = vmor %vm603, %vm604
        %v606 = vsel %vm605, %v597, %v602
        %v607 = vrsqrt.pop %v545
        %v608 = vmul.f32 %v607, %v545
        %v609 = vmul.f32 %v608, %v607
        %v610 = vmul.f32 0.5, %v609
        %v611 = vsub.f32 1.5, %v610
        %v612 = vmul.f32 %v607, %v611
        %vm613 = vweird.f32 %v545
        %vm614 = vweird.f32 %v607
        %vm615 = vmor %vm613, %vm614
        %v616 = vsel %vm615, %v607, %v612
        %v617 = vrsqrt.pop %v546
        %v618 = vmul.f32 %v617, %v546
        %v619 = vmul.f32 %v618, %v617
        %v620 = vmul.f32 0.5, %v619
        %v621 = vsub.f32 1.5, %v620
        %v622 = vmul.f32 %v617, %v621
        %vm623 = vweird.f32 %v546
        %vm624 = vweird.f32 %v617
        %vm625 = vmor %vm623, %vm624
        %v626 = vsel %vm625, %v617, %v622
        %v627 = vmul.f32 %v539, 0.5
        %v628 = vmul.f32 %v540, 0.5
        %v629 = vmul.f32 %v541, 0.5
        %v630 = vmul.f32 %v542, 0.5
        %v631 = vmul.f32 %v543, 0.5
        %v632 = vmul.f32 %v544, 0.5
        %v633 = vmul.f32 %v545, 0.5
        %v634 = vmul.f32 %v546, 0.5
        %v635 = vmul.f32 %v627, %v556
        %v636 = vmul.f32 %v628, %v566
        %v637 = vmul.f32 %v629, %v576
        %v638 = vmul.f32 %v630, %v586
        %v639 = vmul.f32 %v631, %v596
        %v640 = vmul.f32 %v632, %v606
        %v641 = vmul.f32 %v633, %v616
        %v642 = vmul.f32 %v634, %v626
        %v643 = vmul.f32 %v635, %v556
        %v644 = vmul.f32 %v636, %v566
        %v645 = vmul.f32 %v637, %v576
        %v646 = vmul.f32 %v638, %v586
        %v647 = vmul.f32 %v639, %v596
        %v648 = vmul.f32 %v640, %v606
        %v649 = vmul.f32 %v641, %v616
        %v650 = vmul.f32 %v642, %v626
        %v651 = vsub.f32 1.5, %v643
        %v652 = vsub.f32 1.5, %v644
        %v653 = vsub.f32 1.5, %v645
        %v654 = vsub.f32 1.5, %v646
        %v655 = vsub.f32 1.5, %v647
        %v656 = vsub.f32 1.5, %v648
        %v657 = vsub.f32 1.5, %v649
        %v658 = vsub.f32 1.5, %v650
        %v659 = vmul.f32 %v556, %v651
        %v660 = vmul.f32 %v566, %v652
        %v661 = vmul.f32 %v576, %v653
        %v662 = vmul.f32 %v586, %v654
        %v663 = vmul.f32 %v596, %v655
        %v664 = vmul.f32 %v606, %v656
        %v665 = vmul.f32 %v616, %v657
        %v666 = vmul.f32 %v626, %v658
        %v667 = vmul.f32 %v443, %v659
        %v668 = vmul.f32 %v444, %v660
        %v669 = vmul.f32 %v445, %v661
        %v670 = vmul.f32 %v446, %v662
        %v671 = vmul.f32 %v447, %v663
        %v672 = vmul.f32 %v448, %v664
        %v673 = vmul.f32 %v449, %v665
        %v674 = vmul.f32 %v450, %v666
        %v675 = vlaneseq
        %v676 = vshrl.u32 %v675, 7
        %vm677 = vcmp.eq.s32.totalorder %v676, 2
        %v678 = vsub.f32 %v435, 1.0
        %v679 = vsub.f32 %v436, 1.0
        %v680 = vsub.f32 %v437, 1.0
        %v681 = vsub.f32 %v438, 1.0
        %v682 = vsub.f32 %v439, 1.0
        %v683 = vsub.f32 %v440, 1.0
        %v684 = vsub.f32 %v441, 1.0
        %v685 = vsub.f32 %v442, 1.0
        %v686 = vsel %vm677, %v678, %v435
        %v687 = vsel %vm677, %v679, %v436
        %v688 = vsel %vm677, %v680, %v437
        %v689 = vsel %vm677, %v681, %v438
        %v690 = vsel %vm677, %v682, %v439
        %v691 = vsel %vm677, %v683, %v440
        %v692 = vsel %vm677, %v684, %v441
        %v693 = vsel %vm677, %v685, %v442
        %v694 = vmul.f32 %v686, %v686
        %v695 = vmul.f32 %v687, %v687
        %v696 = vmul.f32 %v688, %v688
        %v697 = vmul.f32 %v689, %v689
        %v698 = vmul.f32 %v690, %v690
        %v699 = vmul.f32 %v691, %v691
        %v700 = vmul.f32 %v692, %v692
        %v701 = vmul.f32 %v693, %v693
        %v702 = vsel %vm250, %v694, 0.0
        %v703 = vrot.slane %v702, 4
        %v704 = vadd.f32 %v702, %v703
        %v705 = vrot.slane %v704, 2
        %v706 = vadd.f32 %v704, %v705
        %v707 = vrot.slane %v706, 1
        %v708 = vadd.f32 %v706, %v707
        %v709 = vsel %vm250, %v695, 0.0
        %v710 = vrot.slane %v709, 4
        %v711 = vadd.f32 %v709, %v710
        %v712 = vrot.slane %v711, 2
        %v713 = vadd.f32 %v711, %v712
        %v714 = vrot.slane %v713, 1
        %v715 = vadd.f32 %v713, %v714
        %v716 = vsel %vm250, %v696, 0.0
        %v717 = vrot.slane %v716, 4
        %v718 = vadd.f32 %v716, %v717
        %v719 = vrot.slane %v718, 2
        %v720 = vadd.f32 %v718, %v719
        %v721 = vrot.slane %v720, 1
        %v722 = vadd.f32 %v720, %v721
        %v723 = vsel %vm250, %v697, 0.0
        %v724 = vrot.slane %v723, 4
        %v725 = vadd.f32 %v723, %v724
        %v726 = vrot.slane %v725, 2
        %v727 = vadd.f32 %v725, %v726
        %v728 = vrot.slane %v727, 1
        %v729 = vadd.f32 %v727, %v728
        %v730 = vsel %vm250, %v698, 0.0
        %v731 = vrot.slane %v730, 4
        %v732 = vadd.f32 %v730, %v731
        %v733 = vrot.slane %v732, 2
        %v734 = vadd.f32 %v732, %v733
        %v735 = vrot.slane %v734, 1
        %v736 = vadd.f32 %v734, %v735
        %v737 = vsel %vm250, %v699, 0.0
        %v738 = vrot.slane %v737, 4
        %v739 = vadd.f32 %v737, %v738
        %v740 = vrot.slane %v739, 2
        %v741 = vadd.f32 %v739, %v740
        %v742 = vrot.slane %v741, 1
        %v743 = vadd.f32 %v741, %v742
        %v744 = vsel %vm250, %v700, 0.0
        %v745 = vrot.slane %v744, 4
        %v746 = vadd.f32 %v744, %v745
        %v747 = vrot.slane %v746, 2
        %v748 = vadd.f32 %v746, %v747
        %v749 = vrot.slane %v748, 1
        %v750 = vadd.f32 %v748, %v749
        %v751 = vsel %vm250, %v701, 0.0
        %v752 = vrot.slane %v751, 4
        %v753 = vadd.f32 %v751, %v752
        %v754 = vrot.slane %v753, 2
        %v755 = vadd.f32 %v753, %v754
        %v756 = vrot.slane %v755, 1
        %v757 = vadd.f32 %v755, %v756
        %v758 = vmax.f32 %v708, 1e-24
        %v759 = vmax.f32 %v715, 1e-24
        %v760 = vmax.f32 %v722, 1e-24
        %v761 = vmax.f32 %v729, 1e-24
        %v762 = vmax.f32 %v736, 1e-24
        %v763 = vmax.f32 %v743, 1e-24
        %v764 = vmax.f32 %v750, 1e-24
        %v765 = vmax.f32 %v757, 1e-24
        %v766 = vrsqrt.pop %v758
        %v767 = vmul.f32 %v766, %v758
        %v768 = vmul.f32 %v767, %v766
        %v769 = vmul.f32 0.5, %v768
        %v770 = vsub.f32 1.5, %v769
        %v771 = vmul.f32 %v766, %v770
        %vm772 = vweird.f32 %v758
        %vm773 = vweird.f32 %v766
        %vm774 = vmor %vm772, %vm773
        %v775 = vsel %vm774, %v766, %v771
        %v776 = vrsqrt.pop %v759
        %v777 = vmul.f32 %v776, %v759
        %v778 = vmul.f32 %v777, %v776
        %v779 = vmul.f32 0.5, %v778
        %v780 = vsub.f32 1.5, %v779
        %v781 = vmul.f32 %v776, %v780
        %vm782 = vweird.f32 %v759
        %vm783 = vweird.f32 %v776
        %vm784 = vmor %vm782, %vm783
        %v785 = vsel %vm784, %v776, %v781
        %v786 = vrsqrt.pop %v760
        %v787 = vmul.f32 %v786, %v760
        %v788 = vmul.f32 %v787, %v786
        %v789 = vmul.f32 0.5, %v788
        %v790 = vsub.f32 1.5, %v789
        %v791 = vmul.f32 %v786, %v790
        %vm792 = vweird.f32 %v760
        %vm793 = vweird.f32 %v786
        %vm794 = vmor %vm792, %vm793
        %v795 = vsel %vm794, %v786, %v791
        %v796 = vrsqrt.pop %v761
        %v797 = vmul.f32 %v796, %v761
        %v798 = vmul.f32 %v797, %v796
        %v799 = vmul.f32 0.5, %v798
        %v800 = vsub.f32 1.5, %v799
        %v801 = vmul.f32 %v796, %v800
        %vm802 = vweird.f32 %v761
        %vm803 = vweird.f32 %v796
        %vm804 = vmor %vm802, %vm803
        %v805 = vsel %vm804, %v796, %v801
        %v806 = vrsqrt.pop %v762
        %v807 = vmul.f32 %v806, %v762
        %v808 = vmul.f32 %v807, %v806
        %v809 = vmul.f32 0.5, %v808
        %v810 = vsub.f32 1.5, %v809
        %v811 = vmul.f32 %v806, %v810
        %vm812 = vweird.f32 %v762
        %vm813 = vweird.f32 %v806
        %vm814 = vmor %vm812, %vm813
        %v815 = vsel %vm814, %v806, %v811
        %v816 = vrsqrt.pop %v763
        %v817 = vmul.f32 %v816, %v763
        %v818 = vmul.f32 %v817, %v816
        %v819 = vmul.f32 0.5, %v818
        %v820 = vsub.f32 1.5, %v819
        %v821 = vmul.f32 %v816, %v820
        %vm822 = vweird.f32 %v763
        %vm823 = vweird.f32 %v816
        %vm824 = vmor %vm822, %vm823
        %v825 = vsel %vm824, %v816, %v821
        %v826 = vrsqrt.pop %v764
        %v827 = vmul.f32 %v826, %v764
        %v828 = vmul.f32 %v827, %v826
        %v829 = vmul.f32 0.5, %v828
        %v830 = vsub.f32 1.5, %v829
        %v831 = vmul.f32 %v826, %v830
        %vm832 = vweird.f32 %v764
        %vm833 = vweird.f32 %v826
        %vm834 = vmor %vm832, %vm833
        %v835 = vsel %vm834, %v826, %v831
        %v836 = vrsqrt.pop %v765
        %v837 = vmul.f32 %v836, %v765
        %v838 = vmul.f32 %v837, %v836
        %v839 = vmul.f32 0.5, %v838
        %v840 = vsub.f32 1.5, %v839
        %v841 = vmul.f32 %v836, %v840
        %vm842 = vweird.f32 %v765
        %vm843 = vweird.f32 %v836
        %vm844 = vmor %vm842, %vm843
        %v845 = vsel %vm844, %v836, %v841
        %v846 = vmul.f32 %v758, 0.5
        %v847 = vmul.f32 %v759, 0.5
        %v848 = vmul.f32 %v760, 0.5
        %v849 = vmul.f32 %v761, 0.5
        %v850 = vmul.f32 %v762, 0.5
        %v851 = vmul.f32 %v763, 0.5
        %v852 = vmul.f32 %v764, 0.5
        %v853 = vmul.f32 %v765, 0.5
        %v854 = vmul.f32 %v846, %v775
        %v855 = vmul.f32 %v847, %v785
        %v856 = vmul.f32 %v848, %v795
        %v857 = vmul.f32 %v849, %v805
        %v858 = vmul.f32 %v850, %v815
        %v859 = vmul.f32 %v851, %v825
        %v860 = vmul.f32 %v852, %v835
        %v861 = vmul.f32 %v853, %v845
        %v862 = vmul.f32 %v854, %v775
        %v863 = vmul.f32 %v855, %v785
        %v864 = vmul.f32 %v856, %v795
        %v865 = vmul.f32 %v857, %v805
        %v866 = vmul.f32 %v858, %v815
        %v867 = vmul.f32 %v859, %v825
        %v868 = vmul.f32 %v860, %v835
        %v869 = vmul.f32 %v861, %v845
        %v870 = vsub.f32 1.5, %v862
        %v871 = vsub.f32 1.5, %v863
        %v872 = vsub.f32 1.5, %v864
        %v873 = vsub.f32 1.5, %v865
        %v874 = vsub.f32 1.5, %v866
        %v875 = vsub.f32 1.5, %v867
        %v876 = vsub.f32 1.5, %v868
        %v877 = vsub.f32 1.5, %v869
        %v878 = vmul.f32 %v775, %v870
        %v879 = vmul.f32 %v785, %v871
        %v880 = vmul.f32 %v795, %v872
        %v881 = vmul.f32 %v805, %v873
        %v882 = vmul.f32 %v815, %v874
        %v883 = vmul.f32 %v825, %v875
        %v884 = vmul.f32 %v835, %v876
        %v885 = vmul.f32 %v845, %v877
        %v886 = vmul.f32 %v686, %v878
        %v887 = vmul.f32 %v687, %v879
        %v888 = vmul.f32 %v688, %v880
        %v889 = vmul.f32 %v689, %v881
        %v890 = vmul.f32 %v690, %v882
        %v891 = vmul.f32 %v691, %v883
        %v892 = vmul.f32 %v692, %v884
        %v893 = vmul.f32 %v693, %v885
        %v902 = vrot.slane %v667, 3
        %v903 = vrot.slane %v668, 3
        %v904 = vrot.slane %v669, 3
        %v905 = vrot.slane %v670, 3
        %v906 = vrot.slane %v671, 3
        %v907 = vrot.slane %v672, 3
        %v908 = vrot.slane %v673, 3
        %v909 = vrot.slane %v674, 3
        %v918 = vmul.f32 %v886, %v902
        %v919 = vmul.f32 %v887, %v903
        %v920 = vmul.f32 %v888, %v904
        %v921 = vmul.f32 %v889, %v905
        %v922 = vmul.f32 %v890, %v906
        %v923 = vmul.f32 %v891, %v907
        %v924 = vmul.f32 %v892, %v908
        %v925 = vmul.f32 %v893, %v909
        %v926 = vsel %vm250, %v918, 0.0
        %v927 = vrot.slane %v926, 4
        %v928 = vadd.f32 %v926, %v927
        %v929 = vrot.slane %v928, 2
        %v930 = vadd.f32 %v928, %v929
        %v931 = vrot.slane %v930, 1
        %v932 = vadd.f32 %v930, %v931
        %v933 = vsel %vm250, %v919, 0.0
        %v934 = vrot.slane %v933, 4
        %v935 = vadd.f32 %v933, %v934
        %v936 = vrot.slane %v935, 2
        %v937 = vadd.f32 %v935, %v936
        %v938 = vrot.slane %v937, 1
        %v939 = vadd.f32 %v937, %v938
        %v940 = vsel %vm250, %v920, 0.0
        %v941 = vrot.slane %v940, 4
        %v942 = vadd.f32 %v940, %v941
        %v943 = vrot.slane %v942, 2
        %v944 = vadd.f32 %v942, %v943
        %v945 = vrot.slane %v944, 1
        %v946 = vadd.f32 %v944, %v945
        %v947 = vsel %vm250, %v921, 0.0
        %v948 = vrot.slane %v947, 4
        %v949 = vadd.f32 %v947, %v948
        %v950 = vrot.slane %v949, 2
        %v951 = vadd.f32 %v949, %v950
        %v952 = vrot.slane %v951, 1
        %v953 = vadd.f32 %v951, %v952
        %v954 = vsel %vm250, %v922, 0.0
        %v955 = vrot.slane %v954, 4
        %v956 = vadd.f32 %v954, %v955
        %v957 = vrot.slane %v956, 2
        %v958 = vadd.f32 %v956, %v957
        %v959 = vrot.slane %v958, 1
        %v960 = vadd.f32 %v958, %v959
        %v961 = vsel %vm250, %v923, 0.0
        %v962 = vrot.slane %v961, 4
        %v963 = vadd.f32 %v961, %v962
        %v964 = vrot.slane %v963, 2
        %v965 = vadd.f32 %v963, %v964
        %v966 = vrot.slane %v965, 1
        %v967 = vadd.f32 %v965, %v966
        %v968 = vsel %vm250, %v924, 0.0
        %v969 = vrot.slane %v968, 4
        %v970 = vadd.f32 %v968, %v969
        %v971 = vrot.slane %v970, 2
        %v972 = vadd.f32 %v970, %v971
        %v973 = vrot.slane %v972, 1
        %v974 = vadd.f32 %v972, %v973
        %v975 = vsel %vm250, %v925, 0.0
        %v976 = vrot.slane %v975, 4
        %v977 = vadd.f32 %v975, %v976
        %v978 = vrot.slane %v977, 2
        %v979 = vadd.f32 %v977, %v978
        %v980 = vrot.slane %v979, 1
        %v981 = vadd.f32 %v979, %v980
        %v982 = vld [vmem:[%s2] sm:$0xff]
        %v983 = vsub.f32 %v932, 1.0
        %v984 = vsub.f32 %v939, 1.0
        %v985 = vsub.f32 %v946, 1.0
        %v986 = vsub.f32 %v953, 1.0
        %v987 = vsub.f32 %v960, 1.0
        %v988 = vsub.f32 %v967, 1.0
        %v989 = vsub.f32 %v974, 1.0
        %v990 = vsub.f32 %v981, 1.0
        %992 = vset.pattern.permute.xlu0 0
        %993 = vperm.xlu0 %992, %v982
        %v994 = vpop.permute.xlu0 %993
        %v996 = vmul.f32 %v994, %v983
        %v997 = vmul.f32 %v994, %v984
        %v998 = vmul.f32 %v994, %v985
        %v999 = vmul.f32 %v994, %v986
        %v1000 = vmul.f32 %v994, %v987
        %v1001 = vmul.f32 %v994, %v988
        %v1002 = vmul.f32 %v994, %v989
        %v1003 = vmul.f32 %v994, %v990
        %v1004 = vmul.f32 %v996, 1.442695
        %v1005 = vpow.pop %v1004
        %v1006 = vmul.f32 %v997, 1.442695
        %v1007 = vpow.pop %v1006
        %v1008 = vmul.f32 %v998, 1.442695
        %v1009 = vpow.pop %v1008
        %v1010 = vmul.f32 %v999, 1.442695
        %v1011 = vpow.pop %v1010
        %v1012 = vmul.f32 %v1000, 1.442695
        %v1013 = vpow.pop %v1012
        %v1014 = vmul.f32 %v1001, 1.442695
        %v1015 = vpow.pop %v1014
        %v1016 = vmul.f32 %v1002, 1.442695
        %v1017 = vpow.pop %v1016
        %v1018 = vmul.f32 %v1003, 1.442695
        %v1019 = vpow.pop %v1018
        %v1020 = vld [vmem:[%s202] sm:$0xff]
        %v1021 = vld [vmem:[%s202 + $0x8] sm:$0xff]
        %v1022 = vld [vmem:[%s202 + $0x10] sm:$0xff]
        %v1023 = vld [vmem:[%s202 + $0x18] sm:$0xff]
        %v1024 = vld [vmem:[%s202 + $0x20] sm:$0xff]
        %v1025 = vld [vmem:[%s202 + $0x28] sm:$0xff]
        %v1026 = vld [vmem:[%s202 + $0x30] sm:$0xff]
        %v1027 = vld [vmem:[%s202 + $0x38] sm:$0xff]
        %v1028 = vand.u32 2147483647, %v1020
        %v1029 = vand.u32 2147483647, %v1021
        %v1030 = vand.u32 2147483647, %v1022
        %v1031 = vand.u32 2147483647, %v1023
        %v1032 = vand.u32 2147483647, %v1024
        %v1033 = vand.u32 2147483647, %v1025
        %v1034 = vand.u32 2147483647, %v1026
        %v1035 = vand.u32 2147483647, %v1027
        %v1036 = vmul.f32 %v1028, %v1005
        %v1037 = vmul.f32 %v1029, %v1007
        %v1038 = vmul.f32 %v1030, %v1009
        %v1039 = vmul.f32 %v1031, %v1011
        %v1040 = vmul.f32 %v1032, %v1013
        %v1041 = vmul.f32 %v1033, %v1015
        %v1042 = vmul.f32 %v1034, %v1017
        %v1043 = vmul.f32 %v1035, %v1019
        %1044 = vst [vmem:[%s230] sm:$0xff] %v1036
        %1045 = vst [vmem:[%s230 + $0x8] sm:$0xff] %v1037
        %1046 = vst [vmem:[%s230 + $0x10] sm:$0xff] %v1038
        %1047 = vst [vmem:[%s230 + $0x18] sm:$0xff] %v1039
        %1048 = vst [vmem:[%s230 + $0x20] sm:$0xff] %v1040
        %1049 = vst [vmem:[%s230 + $0x28] sm:$0xff] %v1041
        %1050 = vst [vmem:[%s230 + $0x30] sm:$0xff] %v1042
        %1051 = vst [vmem:[%s230 + $0x38] sm:$0xff] %v1043
        %v1052 = vld [vmem:[%s202 + $0x40] sm:$0xff]
        %v1053 = vld [vmem:[%s202 + $0x48] sm:$0xff]
        %v1054 = vld [vmem:[%s202 + $0x50] sm:$0xff]
        %v1055 = vld [vmem:[%s202 + $0x58] sm:$0xff]
        %v1056 = vld [vmem:[%s202 + $0x60] sm:$0xff]
        %v1057 = vld [vmem:[%s202 + $0x68] sm:$0xff]
        %v1058 = vld [vmem:[%s202 + $0x70] sm:$0xff]
        %v1059 = vld [vmem:[%s202 + $0x78] sm:$0xff]
        %v1060 = vand.u32 2147483647, %v1052
        %v1061 = vand.u32 2147483647, %v1053
        %v1062 = vand.u32 2147483647, %v1054
        %v1063 = vand.u32 2147483647, %v1055
        %v1064 = vand.u32 2147483647, %v1056
        %v1065 = vand.u32 2147483647, %v1057
        %v1066 = vand.u32 2147483647, %v1058
        %v1067 = vand.u32 2147483647, %v1059
        %v1068 = vmul.f32 %v1060, %v1005
        %v1069 = vmul.f32 %v1061, %v1007
        %v1070 = vmul.f32 %v1062, %v1009
        %v1071 = vmul.f32 %v1063, %v1011
        %v1072 = vmul.f32 %v1064, %v1013
        %v1073 = vmul.f32 %v1065, %v1015
        %v1074 = vmul.f32 %v1066, %v1017
        %v1075 = vmul.f32 %v1067, %v1019
        %1076 = vst [vmem:[%s230 + $0x40] sm:$0xff] %v1068
        %1077 = vst [vmem:[%s230 + $0x48] sm:$0xff] %v1069
        %1078 = vst [vmem:[%s230 + $0x50] sm:$0xff] %v1070
        %1079 = vst [vmem:[%s230 + $0x58] sm:$0xff] %v1071
        %1080 = vst [vmem:[%s230 + $0x60] sm:$0xff] %v1072
        %1081 = vst [vmem:[%s230 + $0x68] sm:$0xff] %v1073
        %1082 = vst [vmem:[%s230 + $0x70] sm:$0xff] %v1074
        %1083 = vst [vmem:[%s230 + $0x78] sm:$0xff] %v1075
        %v1084 = vld [vmem:[%s202 + $0x80] sm:$0xff]
        %v1085 = vld [vmem:[%s202 + $0x88] sm:$0xff]
        %v1086 = vld [vmem:[%s202 + $0x90] sm:$0xff]
        %v1087 = vld [vmem:[%s202 + $0x98] sm:$0xff]
        %v1088 = vld [vmem:[%s202 + $0xa0] sm:$0xff]
        %v1089 = vld [vmem:[%s202 + $0xa8] sm:$0xff]
        %v1090 = vld [vmem:[%s202 + $0xb0] sm:$0xff]
        %v1091 = vld [vmem:[%s202 + $0xb8] sm:$0xff]
        %v1092 = vand.u32 2147483647, %v1084
        %v1093 = vand.u32 2147483647, %v1085
        %v1094 = vand.u32 2147483647, %v1086
        %v1095 = vand.u32 2147483647, %v1087
        %v1096 = vand.u32 2147483647, %v1088
        %v1097 = vand.u32 2147483647, %v1089
        %v1098 = vand.u32 2147483647, %v1090
        %v1099 = vand.u32 2147483647, %v1091
        %v1100 = vmul.f32 %v1092, %v1005
        %v1101 = vmul.f32 %v1093, %v1007
        %v1102 = vmul.f32 %v1094, %v1009
        %v1103 = vmul.f32 %v1095, %v1011
        %v1104 = vmul.f32 %v1096, %v1013
        %v1105 = vmul.f32 %v1097, %v1015
        %v1106 = vmul.f32 %v1098, %v1017
        %v1107 = vmul.f32 %v1099, %v1019
        %1108 = vst [vmem:[%s230 + $0x80] sm:$0xff] %v1100
        %1109 = vst [vmem:[%s230 + $0x88] sm:$0xff] %v1101
        %1110 = vst [vmem:[%s230 + $0x90] sm:$0xff] %v1102
        %1111 = vst [vmem:[%s230 + $0x98] sm:$0xff] %v1103
        %1112 = vst [vmem:[%s230 + $0xa0] sm:$0xff] %v1104
        %1113 = vst [vmem:[%s230 + $0xa8] sm:$0xff] %v1105
        %1114 = vst [vmem:[%s230 + $0xb0] sm:$0xff] %v1106
        %1115 = vst [vmem:[%s230 + $0xb8] sm:$0xff] %v1107
        %s1116 = sand.u32 %s104, 1
        %s1117 = scalar_lea.sflag [#allocation4], %s1116
        %s1118 = sand.u32 %s104, 1
        %s1119 = smul.addr %s1118, 192
        %s1120 = scalar_lea.vmem [#allocation7], %s1119
        // Predicated region
        $region41: #{tpu_custom_call.1} parent=31 // pred_check
          %p1121 = pneg %p114
        $region42: #{tpu_custom_call.1} parent=31 // pred_check_branch
          %1123 = sbr.rel (%p1121) target = $region44
        $region43: #{tpu_custom_call.1} parent=31 // pred_region
          %s1124 = smul.u32 8, %s23
          %1126 = vsyncadd %s1117, 0
          %s1127 = smul.addr %s1124, 8
          %s1128 = scalar_lea.hbm %s3, %s1127
          %s1129 = sshll.u32 %s1120, 4
          %s1130 = int_to_ptr.vmem [resolvable:$true] %s1129
          %s1131 = sshll.u32 %s1128, 4
          %s1132 = int_to_ptr.hbm [resolvable:$true] %s1131
          %1137 = dma.vmem_to_hbm [thread:$0]  %s1130, 3072, %s1132, %s1117, 1024, 2048, 64
        $region44: #{tpu_custom_call.1} parent=31 // pred_fallthru
          _
      $region32: #{tpu_custom_call.1} parent=5 // pred_fallthru
        _
      %p1138 = scmp.le.s32.totalorder 2, %s18
      // Predicated region
      $region45: #{tpu_custom_call.1} parent=5 // pred_check
        %p1139 = pneg %p1138
      $region46: #{tpu_custom_call.1} parent=5 // pred_check_branch
        %1141 = sbr.rel (%p1139) target = $region48
      $region47: #{tpu_custom_call.1} parent=5 // pred_region
        %s1142 = ssub.s32 %s18, 2
        // Predicated region
        $region49: #{tpu_custom_call.1} parent=47 // pred_check
          %p1143 = pneg %p120
        $region50: #{tpu_custom_call.1} parent=47 // pred_check_branch
          %1145 = sbr.rel (%p1143) target = $region52
        $region51: #{tpu_custom_call.1} parent=47 // pred_region
          %s1146 = sand.u32 %s105, 1
          %s1147 = scalar_lea.sflag [#allocation4], %s1146
          %s1148 = sand.u32 %s105, 1
          %s1149 = smul.addr %s1148, 192
          %s1150 = scalar_lea.vmem [#allocation7], %s1149
          %1152 = dma.done %s1147, 3072
        $region52: #{tpu_custom_call.1} parent=47 // pred_fallthru
          _
      $region48: #{tpu_custom_call.1} parent=5 // pred_fallthru
        _
    $region6: #{tpu_custom_call.1} parent=1 // loop_footer
      %s22 = sadd.s32 1, %s18
    $region7: #{tpu_custom_call.1} parent=1 // loop_footer_branch
      %17 = sbr.rel target = $region3
    $region8: #{tpu_custom_call.1} parent=1 // loop_exit
      _
    %1153 = vsyncpa [#allocation3], 1
    %s1154 = scalar_lea.sflag [#allocation3], 1
    %1155 = vsyncpa %s1154, 1
    %1156 = vsyncpa [#allocation6], 1
    %s1157 = scalar_lea.sflag [#allocation6], 1
    %1158 = vsyncpa %s1157, 1
    %1159 = vsyncpa [#allocation4], 1
    %s1160 = scalar_lea.sflag [#allocation4], 1
    %1161 = vsyncpa %s1160, 1

</llo_original>
